<compile_context>
chip_gen: v6e
topology: v6e:2x2x1
jax: 0.10.0
libtpu: 0.0.40
codegen_flags: <defaults>
</compile_context>

<pallas_src>
import jax
import jax.numpy as jnp
from jax.experimental import pallas as pl
from jax.experimental.pallas import tpu as pltpu

_LANES = 128


def _linear_residual_hardtanh_kernel(bias_ref, x_ref, w_ref, r_ref, o_ref):
    """One batch tile of clip(x @ w + b + other, -1, 1), fully lane-dense.

    bias_ref : (1,)          f32 SMEM  -- Linear bias
    x_ref    : (R, F*128)    f32 VMEM  -- 128 natural (B, F) rows per block row
    w_ref    : (F*128, 128)  f32 VMEM  -- banded weight matrix (grid-resident)
    r_ref    : (R, 128)      f32 VMEM  -- residual `other`
    o_ref    : (R, 128)      f32 VMEM  -- output
    """
    acc = jnp.dot(x_ref[...], w_ref[...], preferred_element_type=jnp.float32)
    o_ref[...] = jnp.clip(acc + r_ref[...] + bias_ref[0], -1.0, 1.0)


def linear_add_hardtanh(x1, w, b, other, *, tb=65536, force_kernel=False):
    """clip(x1 @ w + b + other, -1, 1) with x1 in its natural (B, F) layout."""
    x1 = jnp.asarray(x1, jnp.float32)
    w = jnp.asarray(w, jnp.float32)
    b = jnp.asarray(b, jnp.float32).reshape(-1)      # accept (O,) or (1, O)
    other = jnp.asarray(other, jnp.float32)

    B, F = x1.shape
    O = w.shape[1]
    assert O == 1 and b.shape == (O,) and other.shape == (B, O)

    # Fast path: small or lane-ragged batches.  Below a few thousand rows the
    # fixed pallas_call launch cost dominates, and a ragged batch would force
    # an HBM pad copy of x; plain XLA fusion wins outright there.
    if not force_kernel and (B < 4096 or B % _LANES != 0):
        return jnp.clip(x1 @ w + b[None, :] + other, -1.0, 1.0)

    # Kernel path.  Pad the batch to >=1024 rows and a multiple of 128 (only
    # copies x when the caller hands us a ragged / tiny forced batch).
    b_pad = max(1024, _LANES * pl.cdiv(B, _LANES))
    if b_pad != B:
        x1 = jnp.pad(x1, ((0, b_pad - B), (0, 0)))
        other = jnp.pad(other, ((0, b_pad - B), (0, 0)))

    G = b_pad // _LANES                # rows of the flattened view
    K = F * _LANES                     # 1280

    # Contiguous row-major reshapes: same linear element order as the natural
    # layout (no transpose, no extra HBM round trip for x under jit).
    x_flat = x1.reshape(G, K)          # (G, 1280)
    r_flat = other.reshape(G, _LANES)  # (G, 128)

    # Banded weight matrix: column m carries w in rows [F*m, F*m + F), so one
    # MXU matmul yields all 128 per-row dot products of a flattened block.
    # 640 KiB, resident in VMEM across the whole grid (constant index_map).
    w_vec = w[:, 0]
    shift = jnp.arange(K, dtype=jnp.int32)[:, None] \
        - F * jnp.arange(_LANES, dtype=jnp.int32)[None, :]
    w_big = jnp.where((shift >= 0) & (shift < F),
                      w_vec[jnp.clip(shift, 0, F - 1)],
                      0.0).astype(jnp.float32)        # (1280, 128)

    # Batch tile: default 65536 rows -> ~7 MiB of double-buffered blocks.
    rows_pb = max(8, 8 * ((tb // _LANES) // 8))       # multiple of 8 sublanes
    rows_pb = min(rows_pb, 8 * (G // 8))              # <= G (G >= 8 here)
    if G >= 16 and pl.cdiv(G, rows_pb) < 2:           # v7x: keep both TCs busy
        rows_pb = 8 * pl.cdiv(pl.cdiv(G, 2), 8)
    grid = (pl.cdiv(G, rows_pb),)

    out_flat = pl.pallas_call(
        _linear_residual_hardtanh_kernel,
        out_shape=jax.ShapeDtypeStruct((G, _LANES), jnp.float32),
        grid=grid,
        in_specs=[
            pl.BlockSpec(memory_space=pltpu.MemorySpace.SMEM),    # bias scalar
            pl.BlockSpec((rows_pb, K), lambda i: (i, 0)),         # x tile
            pl.BlockSpec((K, _LANES), lambda i: (0, 0)),          # weights
            pl.BlockSpec((rows_pb, _LANES), lambda i: (i, 0)),    # residual
        ],
        out_specs=pl.BlockSpec((rows_pb, _LANES), lambda i: (i, 0)),
        compiler_params=pltpu.CompilerParams(
            dimension_semantics=("parallel",),
            vmem_limit_bytes=32 * 1024 * 1024,
        ),
        cost_estimate=pl.CostEstimate(
            flops=22 * b_pad, transcendentals=0, bytes_accessed=48 * b_pad),
    )(b, x_flat, w_big, r_flat)

    return out_flat.reshape(b_pad, O)[:B]


if __name__ == "__main__":
    key = jax.random.PRNGKey(0)
    k_x, k_other, k_w, k_b = jax.random.split(key, 4)

    F, O = 10, 1
    bound = F ** -0.5
    w = jax.random.uniform(k_w, (F, O), minval=-bound, maxval=bound,
                           dtype=jnp.float32)
    b = jax.random.uniform(k_b, (O,), minval=-bound, maxval=bound,
                           dtype=jnp.float32)

    def ref_fn(x, o):
        y = jnp.dot(x, w, precision=jax.lax.Precision.HIGHEST)
        return jnp.clip(y + b[None, :] + o, -1.0, 1.0)

    ok = True

    # 1) Module-sized input (batch=2): dispatches to the fused-XLA fast path.
    x_s = jax.random.normal(k_x, (2, F), dtype=jnp.float32)
    o_s = jax.random.normal(k_other, (2, O), dtype=jnp.float32)
    out_s = jax.block_until_ready(linear_add_hardtanh(x_s, w, b, o_s))
    ok &= out_s.shape == (2, O)
    ok &= bool(jnp.allclose(out_s, ref_fn(x_s, o_s), atol=1e-4))

    # 2) Lane-aligned batch with the Pallas kernel path forced on.
    Bk = 1024
    x_k = jax.random.normal(k_x, (Bk, F), dtype=jnp.float32)
    o_k = jax.random.normal(k_other, (Bk, O), dtype=jnp.float32)
    out_k = jax.block_until_ready(
        linear_add_hardtanh(x_k, w, b, o_k, force_kernel=True))
    ok &= out_k.shape == (Bk, O)
    ok &= bool(jnp.allclose(out_k, ref_fn(x_k, o_k), atol=1e-4))

    assert ok
    print("KERNEL_OK")
</pallas_src>

<mosaic_0001>
module attributes {stable_mosaic.version = 11 : i64} {
  func.func @_linear_residual_hardtanh_kernel(%arg0: i32, %arg1: memref<1xf32, #tpu.memory_space<smem>>, %arg2: memref<8x1280xf32, #tpu.memory_space<vmem>>, %arg3: memref<1280x128xf32, #tpu.memory_space<vmem>>, %arg4: memref<8x128xf32, #tpu.memory_space<vmem>>, %arg5: memref<8x128xf32, #tpu.memory_space<vmem>>) attributes {dimension_semantics = [#tpu.dimension_semantics<parallel>], iteration_bounds = array<i64: 1>, scalar_prefetch = 0 : i64, scratch_operands = 0 : i64, tpu.core_type = #tpu.core_type<tc>, window_params = [{transform_indices = @transform_0, window_bounds = array<i64: 1>}, {transform_indices = @transform_1, window_bounds = array<i64: 8, 1280>}, {pipeline_mode = #tpu.pipeline_mode<synchronous>, transform_indices = @transform_2, window_bounds = array<i64: 1280, 128>}, {transform_indices = @transform_3, window_bounds = array<i64: 8, 128>}, {transform_indices = @transform_4, window_bounds = array<i64: 8, 128>}]} {
    %c0 = arith.constant 0 : index
    %c0_0 = arith.constant 0 : index
    %0 = vector.load %arg2[%c0, %c0_0] : memref<8x1280xf32, #tpu.memory_space<vmem>>, vector<8x1280xf32>
    %c0_1 = arith.constant 0 : index
    %c0_2 = arith.constant 0 : index
    %1 = vector.load %arg3[%c0_1, %c0_2] : memref<1280x128xf32, #tpu.memory_space<vmem>>, vector<1280x128xf32>
    %cst = arith.constant dense<0.000000e+00> : vector<8x128xf32>
    %2 = tpu.matmul %0, %1, %cst {dimension_numbers = #tpu.dot_dimension_numbers<[1], [0], [0], [1], [0, 0, 1, 1], [], []>} : vector<8x1280xf32>, vector<1280x128xf32>, vector<8x128xf32> -> vector<8x128xf32>
    %c0_3 = arith.constant 0 : index
    %c0_4 = arith.constant 0 : index
    %3 = vector.load %arg4[%c0_3, %c0_4] : memref<8x128xf32, #tpu.memory_space<vmem>>, vector<8x128xf32>
    %4 = arith.addf %2, %3 : vector<8x128xf32>
    %c0_5 = arith.constant 0 : index
    %5 = memref.load %arg1[%c0_5] : memref<1xf32, #tpu.memory_space<smem>>
    %6 = vector.broadcast %5 : f32 to vector<8x128xf32>
    %7 = arith.addf %4, %6 : vector<8x128xf32>
    %cst_6 = arith.constant -1.000000e+00 : f32
    %cst_7 = arith.constant 1.000000e+00 : f32
    %8 = vector.broadcast %cst_6 : f32 to vector<8x128xf32>
    %9 = arith.maximumf %8, %7 : vector<8x128xf32>
    %10 = vector.broadcast %cst_7 : f32 to vector<8x128xf32>
    %11 = arith.minimumf %10, %9 : vector<8x128xf32>
    %c0_8 = arith.constant 0 : index
    %c0_9 = arith.constant 0 : index
    %12 = vector.load %arg5[%c0_8, %c0_9] : memref<8x128xf32, #tpu.memory_space<vmem>>, vector<8x128xf32>
    tpu.vector_store %arg5[%c0_8, %c0_9], %11 {strides = array<i32>} : memref<8x128xf32, #tpu.memory_space<vmem>>, vector<8x128xf32>,
    return
  }
  func.func @transform_0(%arg0: i32) -> i32 {
    %c0_i32 = arith.constant 0 : i32
    %c0_i32_0 = arith.constant 0 : i32
    return %c0_i32 : i32
  }
  func.func @transform_1(%arg0: i32) -> (i32, i32) {
    %c0_i32 = arith.constant 0 : i32
    %c0_i32_0 = arith.constant 0 : i32
    return %arg0, %c0_i32 : i32, i32
  }
  func.func @transform_2(%arg0: i32) -> (i32, i32) {
    %c0_i32 = arith.constant 0 : i32
    %c0_i32_0 = arith.constant 0 : i32
    %c0_i32_1 = arith.constant 0 : i32
    return %c0_i32, %c0_i32_0 : i32, i32
  }
  func.func @transform_3(%arg0: i32) -> (i32, i32) {
    %c0_i32 = arith.constant 0 : i32
    %c0_i32_0 = arith.constant 0 : i32
    return %arg0, %c0_i32 : i32, i32
  }
  func.func @transform_4(%arg0: i32) -> (i32, i32) {
    %c0_i32 = arith.constant 0 : i32
    %c0_i32_0 = arith.constant 0 : i32
    return %arg0, %c0_i32 : i32, i32
  }
}

</mosaic_0001>

<llo_original>
// kernel: tpu_custom_call.1
$region0: #{tpu_custom_call.1}
  #allocation0 [shape = 'u32[]', space=smem, size = 0x4, offset = 0x4, fixed_abs, tag = 'smem constant byte address 0x4 - core index']
  #allocation1 [shape = 'u32[144,128]{1,0:T(1,128)}', space=vmem, size = 0x12000, scoped, tag = 'internal scratch']
  #allocation2 [shape = 'f32[1]{0:T(128)S(6)}', space=smem, size = 0x200, scoped, tag = 'scoped memory for tpu_custom_call.1']
  %s0 = inlined_call_operand.<no memory space> [shape: f32[1], index: 0, kind: input, shape index: {}]
  %s1 = inlined_call_operand.hbm [shape: f32[8,1280], index: 1, kind: input, shape index: {}]
  %s2 = inlined_call_operand.hbm [shape: f32[1280,128], index: 2, kind: input, shape index: {}]
  %s3 = inlined_call_operand.hbm [shape: f32[8,128], index: 3, kind: input, shape index: {}]
  %s4 = inlined_call_operand.hbm [shape: f32[8,128], index: 4, kind: output, shape index: {}]
  %s5 = sld [smem:[#allocation0]]
  $region38: #{tpu_custom_call.1} parent=0
    _
  %s7 = ssub.s32 1, %s5
  %s8 = scalar_select 0, %s7, %s5
  %9 = sst [smem:[#allocation2]] %s0
  $region1: #{tpu_custom_call.1} parent=0
    #allocation3 [shape = 'u8[40960]{0}', space=vmem, size = 0xa000, scoped, tag = 'input window, operand 1, single buffered']
    #allocation4 [shape = 's32[1]{0}', space=sflag, size = 0x4, scoped, tag = 'scoped memory for tpu_custom_call.1']
    #allocation5 [shape = 's32[1]{0}', space=sflag, size = 0x4, scoped, tag = 'scoped memory for tpu_custom_call.1']
    #allocation6 [shape = 'u8[655360]{0}', space=vmem, size = 0xa0000, scoped, tag = 'input window, operand 2, single buffered']
    #allocation7 [shape = 's32[1]{0}', space=sflag, size = 0x4, scoped, tag = 'scoped memory for tpu_custom_call.1']
    #allocation8 [shape = 'u8[4096]{0}', space=vmem, size = 0x1000, scoped, tag = 'input window, operand 3, single buffered']
    #allocation9 [shape = 'u8[4096]{0}', space=vmem, size = 0x1000, scoped, tag = 'output window, operand 0, single buffered']
    %10 = vsyncpa [#allocation4], 0
    %11 = vsyncpa [#allocation7], 0
    %12 = vsyncpa [#allocation5], 0
    // Predicated region
    $region2: #{tpu_custom_call.1} parent=1 // pred_check
      _
    $region3: #{tpu_custom_call.1} parent=1 // pred_check_branch
      %14 = sbr.rel (0) target = $region5
    $region4: #{tpu_custom_call.1} parent=1 // pred_region
      _
    $region5: #{tpu_custom_call.1} parent=1 // pred_fallthru
      _
    // Predicated region
    $region6: #{tpu_custom_call.1} parent=1 // pred_check
      _
    $region7: #{tpu_custom_call.1} parent=1 // pred_check_branch
      %16 = sbr.rel (0) target = $region9
    $region8: #{tpu_custom_call.1} parent=1 // pred_region
      %s18 = ssub.s32 1280, 1280
      %19 = vsyncadd [#allocation4], %s18
      %s21 = sshll.u32 [#allocation3], 4
      %s22 = int_to_ptr.vmem [resolvable:$true] %s21
      %24 = dma.hbm_to_vmem [thread:$0]  %s1, 1280, %s22, [#allocation4]
    $region9: #{tpu_custom_call.1} parent=1 // pred_fallthru
      _
    // Predicated region
    $region10: #{tpu_custom_call.1} parent=1 // pred_check
      _
    $region11: #{tpu_custom_call.1} parent=1 // pred_check_branch
      %26 = sbr.rel (0) target = $region13
    $region12: #{tpu_custom_call.1} parent=1 // pred_region
      %s28 = ssub.s32 20480, 20480
      %29 = vsyncadd [#allocation7], %s28
      %s30 = sshll.u32 [#allocation6], 4
      %s31 = int_to_ptr.vmem [resolvable:$true] %s30
      %36 = dma.hbm_to_vmem [thread:$0]  %s2, 20480, %s31, [#allocation7], 128, 128, 8
    $region13: #{tpu_custom_call.1} parent=1 // pred_fallthru
      _
    // Predicated region
    $region14: #{tpu_custom_call.1} parent=1 // pred_check
      _
    $region15: #{tpu_custom_call.1} parent=1 // pred_check_branch
      %38 = sbr.rel (0) target = $region17
    $region16: #{tpu_custom_call.1} parent=1 // pred_region
      %s40 = ssub.s32 128, 128
      %41 = vsyncadd [#allocation7], %s40
      %s43 = sshll.u32 [#allocation8], 4
      %s44 = int_to_ptr.vmem [resolvable:$true] %s43
      %46 = dma.hbm_to_vmem [thread:$0]  %s3, 128, %s44, [#allocation7]
    $region17: #{tpu_custom_call.1} parent=1 // pred_fallthru
      _
    // Predicated region
    $region18: #{tpu_custom_call.1} parent=1 // pred_check
      _
    $region19: #{tpu_custom_call.1} parent=1 // pred_check_branch
      %48 = sbr.rel (0) target = $region21
    $region20: #{tpu_custom_call.1} parent=1 // pred_region
      %49 = dma.done [#allocation4], 1280
    $region21: #{tpu_custom_call.1} parent=1 // pred_fallthru
      _
    // Predicated region
    $region22: #{tpu_custom_call.1} parent=1 // pred_check
      _
    $region23: #{tpu_custom_call.1} parent=1 // pred_check_branch
      %51 = sbr.rel (0) target = $region25
    $region24: #{tpu_custom_call.1} parent=1 // pred_region
      %52 = dma.done [#allocation7], 20480
    $region25: #{tpu_custom_call.1} parent=1 // pred_fallthru
      _
    // Predicated region
    $region26: #{tpu_custom_call.1} parent=1 // pred_check
      _
    $region27: #{tpu_custom_call.1} parent=1 // pred_check_branch
      %54 = sbr.rel (0) target = $region29
    $region28: #{tpu_custom_call.1} parent=1 // pred_region
      %55 = dma.done [#allocation7], 128
    $region29: #{tpu_custom_call.1} parent=1 // pred_fallthru
      _
    %v56 = vld [vmem:[#allocation3] sm:$0xff]
    %v57 = vld [vmem:[#allocation3 + $0x8] sm:$0xff]
    %v58 = vld [vmem:[#allocation3 + $0x10] sm:$0xff]
    %v59 = vld [vmem:[#allocation3 + $0x18] sm:$0xff]
    %v60 = vld [vmem:[#allocation3 + $0x20] sm:$0xff]
    %v61 = vld [vmem:[#allocation3 + $0x28] sm:$0xff]
    %v62 = vld [vmem:[#allocation3 + $0x30] sm:$0xff]
    %v63 = vld [vmem:[#allocation3 + $0x38] sm:$0xff]
    %v64 = vld [vmem:[#allocation3 + $0x40] sm:$0xff]
    %v65 = vld [vmem:[#allocation3 + $0x48] sm:$0xff]
    %v66 = vld [vmem:[#allocation6] sm:$0xff]
    %v67 = vld [vmem:[#allocation6 + $0x8] sm:$0xff]
    %v68 = vld [vmem:[#allocation6 + $0x10] sm:$0xff]
    %v69 = vld [vmem:[#allocation6 + $0x18] sm:$0xff]
    %v70 = vld [vmem:[#allocation6 + $0x20] sm:$0xff]
    %v71 = vld [vmem:[#allocation6 + $0x28] sm:$0xff]
    %v72 = vld [vmem:[#allocation6 + $0x30] sm:$0xff]
    %v73 = vld [vmem:[#allocation6 + $0x38] sm:$0xff]
    %v74 = vld [vmem:[#allocation6 + $0x40] sm:$0xff]
    %v75 = vld [vmem:[#allocation6 + $0x48] sm:$0xff]
    %v76 = vld [vmem:[#allocation6 + $0x50] sm:$0xff]
    %v77 = vld [vmem:[#allocation6 + $0x58] sm:$0xff]
    %v78 = vld [vmem:[#allocation6 + $0x60] sm:$0xff]
    %v79 = vld [vmem:[#allocation6 + $0x68] sm:$0xff]
    %v80 = vld [vmem:[#allocation6 + $0x70] sm:$0xff]
    %v81 = vld [vmem:[#allocation6 + $0x78] sm:$0xff]
    %v82 = vld [vmem:[#allocation6 + $0x80] sm:$0xff]
    %v83 = vld [vmem:[#allocation6 + $0x88] sm:$0xff]
    %v84 = vld [vmem:[#allocation6 + $0x90] sm:$0xff]
    %v85 = vld [vmem:[#allocation6 + $0x98] sm:$0xff]
    %v86 = vld [vmem:[#allocation6 + $0xa0] sm:$0xff]
    %v87 = vld [vmem:[#allocation6 + $0xa8] sm:$0xff]
    %v88 = vld [vmem:[#allocation6 + $0xb0] sm:$0xff]
    %v89 = vld [vmem:[#allocation6 + $0xb8] sm:$0xff]
    %v90 = vld [vmem:[#allocation6 + $0xc0] sm:$0xff]
    %v91 = vld [vmem:[#allocation6 + $0xc8] sm:$0xff]
    %v92 = vld [vmem:[#allocation6 + $0xd0] sm:$0xff]
    %v93 = vld [vmem:[#allocation6 + $0xd8] sm:$0xff]
    %v94 = vld [vmem:[#allocation6 + $0xe0] sm:$0xff]
    %v95 = vld [vmem:[#allocation6 + $0xe8] sm:$0xff]
    %v96 = vld [vmem:[#allocation6 + $0xf0] sm:$0xff]
    %v97 = vld [vmem:[#allocation6 + $0xf8] sm:$0xff]
    %v98 = vld [vmem:[#allocation6 + $0x100] sm:$0xff]
    %v99 = vld [vmem:[#allocation6 + $0x108] sm:$0xff]
    %v100 = vld [vmem:[#allocation6 + $0x110] sm:$0xff]
    %v101 = vld [vmem:[#allocation6 + $0x118] sm:$0xff]
    %v102 = vld [vmem:[#allocation6 + $0x120] sm:$0xff]
    %v103 = vld [vmem:[#allocation6 + $0x128] sm:$0xff]
    %v104 = vld [vmem:[#allocation6 + $0x130] sm:$0xff]
    %v105 = vld [vmem:[#allocation6 + $0x138] sm:$0xff]
    %v106 = vld [vmem:[#allocation6 + $0x140] sm:$0xff]
    %v107 = vld [vmem:[#allocation6 + $0x148] sm:$0xff]
    %v108 = vld [vmem:[#allocation6 + $0x150] sm:$0xff]
    %v109 = vld [vmem:[#allocation6 + $0x158] sm:$0xff]
    %v110 = vld [vmem:[#allocation6 + $0x160] sm:$0xff]
    %v111 = vld [vmem:[#allocation6 + $0x168] sm:$0xff]
    %v112 = vld [vmem:[#allocation6 + $0x170] sm:$0xff]
    %v113 = vld [vmem:[#allocation6 + $0x178] sm:$0xff]
    %v114 = vld [vmem:[#allocation6 + $0x180] sm:$0xff]
    %v115 = vld [vmem:[#allocation6 + $0x188] sm:$0xff]
    %v116 = vld [vmem:[#allocation6 + $0x190] sm:$0xff]
    %v117 = vld [vmem:[#allocation6 + $0x198] sm:$0xff]
    %v118 = vld [vmem:[#allocation6 + $0x1a0] sm:$0xff]
    %v119 = vld [vmem:[#allocation6 + $0x1a8] sm:$0xff]
    %v120 = vld [vmem:[#allocation6 + $0x1b0] sm:$0xff]
    %v121 = vld [vmem:[#allocation6 + $0x1b8] sm:$0xff]
    %v122 = vld [vmem:[#allocation6 + $0x1c0] sm:$0xff]
    %v123 = vld [vmem:[#allocation6 + $0x1c8] sm:$0xff]
    %v124 = vld [vmem:[#allocation6 + $0x1d0] sm:$0xff]
    %v125 = vld [vmem:[#allocation6 + $0x1d8] sm:$0xff]
    %v126 = vld [vmem:[#allocation6 + $0x1e0] sm:$0xff]
    %v127 = vld [vmem:[#allocation6 + $0x1e8] sm:$0xff]
    %v128 = vld [vmem:[#allocation6 + $0x1f0] sm:$0xff]
    %v129 = vld [vmem:[#allocation6 + $0x1f8] sm:$0xff]
    %v130 = vld [vmem:[#allocation6 + $0x200] sm:$0xff]
    %v131 = vld [vmem:[#allocation6 + $0x208] sm:$0xff]
    %v132 = vld [vmem:[#allocation6 + $0x210] sm:$0xff]
    %v133 = vld [vmem:[#allocation6 + $0x218] sm:$0xff]
    %v134 = vld [vmem:[#allocation6 + $0x220] sm:$0xff]
    %v135 = vld [vmem:[#allocation6 + $0x228] sm:$0xff]
    %v136 = vld [vmem:[#allocation6 + $0x230] sm:$0xff]
    %v137 = vld [vmem:[#allocation6 + $0x238] sm:$0xff]
    %v138 = vld [vmem:[#allocation6 + $0x240] sm:$0xff]
    %v139 = vld [vmem:[#allocation6 + $0x248] sm:$0xff]
    %v140 = vld [vmem:[#allocation6 + $0x250] sm:$0xff]
    %v141 = vld [vmem:[#allocation6 + $0x258] sm:$0xff]
    %v142 = vld [vmem:[#allocation6 + $0x260] sm:$0xff]
    %v143 = vld [vmem:[#allocation6 + $0x268] sm:$0xff]
    %v144 = vld [vmem:[#allocation6 + $0x270] sm:$0xff]
    %v145 = vld [vmem:[#allocation6 + $0x278] sm:$0xff]
    %v146 = vld [vmem:[#allocation6 + $0x280] sm:$0xff]
    %v147 = vld [vmem:[#allocation6 + $0x288] sm:$0xff]
    %v148 = vld [vmem:[#allocation6 + $0x290] sm:$0xff]
    %v149 = vld [vmem:[#allocation6 + $0x298] sm:$0xff]
    %v150 = vld [vmem:[#allocation6 + $0x2a0] sm:$0xff]
    %v151 = vld [vmem:[#allocation6 + $0x2a8] sm:$0xff]
    %v152 = vld [vmem:[#allocation6 + $0x2b0] sm:$0xff]
    %v153 = vld [vmem:[#allocation6 + $0x2b8] sm:$0xff]
    %v154 = vld [vmem:[#allocation6 + $0x2c0] sm:$0xff]
    %v155 = vld [vmem:[#allocation6 + $0x2c8] sm:$0xff]
    %v156 = vld [vmem:[#allocation6 + $0x2d0] sm:$0xff]
    %v157 = vld [vmem:[#allocation6 + $0x2d8] sm:$0xff]
    %v158 = vld [vmem:[#allocation6 + $0x2e0] sm:$0xff]
    %v159 = vld [vmem:[#allocation6 + $0x2e8] sm:$0xff]
    %v160 = vld [vmem:[#allocation6 + $0x2f0] sm:$0xff]
    %v161 = vld [vmem:[#allocation6 + $0x2f8] sm:$0xff]
    %v162 = vld [vmem:[#allocation6 + $0x300] sm:$0xff]
    %v163 = vld [vmem:[#allocation6 + $0x308] sm:$0xff]
    %v164 = vld [vmem:[#allocation6 + $0x310] sm:$0xff]
    %v165 = vld [vmem:[#allocation6 + $0x318] sm:$0xff]
    %v166 = vld [vmem:[#allocation6 + $0x320] sm:$0xff]
    %v167 = vld [vmem:[#allocation6 + $0x328] sm:$0xff]
    %v168 = vld [vmem:[#allocation6 + $0x330] sm:$0xff]
    %v169 = vld [vmem:[#allocation6 + $0x338] sm:$0xff]
    %v170 = vld [vmem:[#allocation6 + $0x340] sm:$0xff]
    %v171 = vld [vmem:[#allocation6 + $0x348] sm:$0xff]
    %v172 = vld [vmem:[#allocation6 + $0x350] sm:$0xff]
    %v173 = vld [vmem:[#allocation6 + $0x358] sm:$0xff]
    %v174 = vld [vmem:[#allocation6 + $0x360] sm:$0xff]
    %v175 = vld [vmem:[#allocation6 + $0x368] sm:$0xff]
    %v176 = vld [vmem:[#allocation6 + $0x370] sm:$0xff]
    %v177 = vld [vmem:[#allocation6 + $0x378] sm:$0xff]
    %v178 = vld [vmem:[#allocation6 + $0x380] sm:$0xff]
    %v179 = vld [vmem:[#allocation6 + $0x388] sm:$0xff]
    %v180 = vld [vmem:[#allocation6 + $0x390] sm:$0xff]
    %v181 = vld [vmem:[#allocation6 + $0x398] sm:$0xff]
    %v182 = vld [vmem:[#allocation6 + $0x3a0] sm:$0xff]
    %v183 = vld [vmem:[#allocation6 + $0x3a8] sm:$0xff]
    %v184 = vld [vmem:[#allocation6 + $0x3b0] sm:$0xff]
    %v185 = vld [vmem:[#allocation6 + $0x3b8] sm:$0xff]
    %v186 = vld [vmem:[#allocation6 + $0x3c0] sm:$0xff]
    %v187 = vld [vmem:[#allocation6 + $0x3c8] sm:$0xff]
    %v188 = vld [vmem:[#allocation6 + $0x3d0] sm:$0xff]
    %v189 = vld [vmem:[#allocation6 + $0x3d8] sm:$0xff]
    %v190 = vld [vmem:[#allocation6 + $0x3e0] sm:$0xff]
    %v191 = vld [vmem:[#allocation6 + $0x3e8] sm:$0xff]
    %v192 = vld [vmem:[#allocation6 + $0x3f0] sm:$0xff]
    %v193 = vld [vmem:[#allocation6 + $0x3f8] sm:$0xff]
    %v194 = vld [vmem:[#allocation6 + $0x400] sm:$0xff]
    %v195 = vld [vmem:[#allocation6 + $0x408] sm:$0xff]
    %v196 = vld [vmem:[#allocation6 + $0x410] sm:$0xff]
    %v197 = vld [vmem:[#allocation6 + $0x418] sm:$0xff]
    %v198 = vld [vmem:[#allocation6 + $0x420] sm:$0xff]
    %v199 = vld [vmem:[#allocation6 + $0x428] sm:$0xff]
    %v200 = vld [vmem:[#allocation6 + $0x430] sm:$0xff]
    %v201 = vld [vmem:[#allocation6 + $0x438] sm:$0xff]
    %v202 = vld [vmem:[#allocation6 + $0x440] sm:$0xff]
    %v203 = vld [vmem:[#allocation6 + $0x448] sm:$0xff]
    %v204 = vld [vmem:[#allocation6 + $0x450] sm:$0xff]
    %v205 = vld [vmem:[#allocation6 + $0x458] sm:$0xff]
    %v206 = vld [vmem:[#allocation6 + $0x460] sm:$0xff]
    %v207 = vld [vmem:[#allocation6 + $0x468] sm:$0xff]
    %v208 = vld [vmem:[#allocation6 + $0x470] sm:$0xff]
    %v209 = vld [vmem:[#allocation6 + $0x478] sm:$0xff]
    %v210 = vld [vmem:[#allocation6 + $0x480] sm:$0xff]
    %v211 = vld [vmem:[#allocation6 + $0x488] sm:$0xff]
    %v212 = vld [vmem:[#allocation6 + $0x490] sm:$0xff]
    %v213 = vld [vmem:[#allocation6 + $0x498] sm:$0xff]
    %v214 = vld [vmem:[#allocation6 + $0x4a0] sm:$0xff]
    %v215 = vld [vmem:[#allocation6 + $0x4a8] sm:$0xff]
    %v216 = vld [vmem:[#allocation6 + $0x4b0] sm:$0xff]
    %v217 = vld [vmem:[#allocation6 + $0x4b8] sm:$0xff]
    %v218 = vld [vmem:[#allocation6 + $0x4c0] sm:$0xff]
    %v219 = vld [vmem:[#allocation6 + $0x4c8] sm:$0xff]
    %v220 = vld [vmem:[#allocation6 + $0x4d0] sm:$0xff]
    %v221 = vld [vmem:[#allocation6 + $0x4d8] sm:$0xff]
    %v222 = vld [vmem:[#allocation6 + $0x4e0] sm:$0xff]
    %v223 = vld [vmem:[#allocation6 + $0x4e8] sm:$0xff]
    %v224 = vld [vmem:[#allocation6 + $0x4f0] sm:$0xff]
    %v225 = vld [vmem:[#allocation6 + $0x4f8] sm:$0xff]
    %v226 = vld [vmem:[#allocation8] sm:$0xff]
    %227 = vmatprep.subr.mxu0 0.0
    %228 = vmatpush1.msra.mxu0 %v81
    %229 = vmatprep.subr.mxu0 0.0
    %230 = vmatpush1.msra.mxu0 %v80
    %231 = vmatprep.subr.mxu0 0.0
    %232 = vmatpush1.msra.mxu0 %v79
    %233 = vmatprep.subr.mxu0 0.0
    %234 = vmatpush1.msra.mxu0 %v78
    %235 = vmatprep.subr.mxu0 0.0
    %236 = vmatpush1.msra.mxu0 %v77
    %237 = vmatprep.subr.mxu0 0.0
    %238 = vmatpush1.msra.mxu0 %v76
    %239 = vmatprep.subr.mxu0 0.0
    %240 = vmatpush1.msra.mxu0 %v75
    %241 = vmatprep.subr.mxu0 0.0
    %242 = vmatpush1.msra.mxu0 %v74
    %243 = vmatprep.subr.mxu0 0.0
    %244 = vmatpush1.msra.mxu0 %v73
    %245 = vmatprep.subr.mxu0 0.0
    %246 = vmatpush1.msra.mxu0 %v72
    %247 = vmatprep.subr.mxu0 0.0
    %248 = vmatpush1.msra.mxu0 %v71
    %249 = vmatprep.subr.mxu0 0.0
    %250 = vmatpush1.msra.mxu0 %v70
    %251 = vmatprep.subr.mxu0 0.0
    %252 = vmatpush1.msra.mxu0 %v69
    %253 = vmatprep.subr.mxu0 0.0
    %254 = vmatpush1.msra.mxu0 %v68
    %255 = vmatprep.subr.mxu0 0.0
    %256 = vmatpush1.msra.mxu0 %v67
    %257 = vmatprep.subr.mxu0 0.0
    %258 = vmatpush1.msra.mxu0 %v66
    %259 = vmatprep.subr.mxu0 0.0
    %260 = vmatpush2.msra.mxu0 %v97
    %261 = vmatprep.subr.mxu0 0.0
    %262 = vmatpush2.msra.mxu0 %v96
    %263 = vmatprep.subr.mxu0 0.0
    %264 = vmatpush2.msra.mxu0 %v95
    %265 = vmatprep.subr.mxu0 0.0
    %266 = vmatpush2.msra.mxu0 %v94
    %267 = vmatprep.subr.mxu0 0.0
    %268 = vmatpush2.msra.mxu0 %v93
    %269 = vmatprep.subr.mxu0 0.0
    %270 = vmatpush2.msra.mxu0 %v92
    %271 = vmatprep.subr.mxu0 0.0
    %272 = vmatpush2.msra.mxu0 %v91
    %273 = vmatprep.subr.mxu0 0.0
    %274 = vmatpush2.msra.mxu0 %v90
    %275 = vmatprep.subr.mxu0 0.0
    %276 = vmatpush2.msra.mxu0 %v89
    %277 = vmatprep.subr.mxu0 0.0
    %278 = vmatpush2.msra.mxu0 %v88
    %279 = vmatprep.subr.mxu0 0.0
    %280 = vmatpush2.msra.mxu0 %v87
    %281 = vmatprep.subr.mxu0 0.0
    %282 = vmatpush2.msra.mxu0 %v86
    %283 = vmatprep.subr.mxu0 0.0
    %284 = vmatpush2.msra.mxu0 %v85
    %285 = vmatprep.subr.mxu0 0.0
    %286 = vmatpush2.msra.mxu0 %v84
    %287 = vmatprep.subr.mxu0 0.0
    %288 = vmatpush2.msra.mxu0 %v83
    %289 = vmatprep.subr.mxu0 0.0
    %290 = vmatpush2.msra.mxu0 %v82
    %291 = vmatprep.mubr.f32.mxu0 %v57
    %292 = vmatmul.mubr.f32.gmra.mxu0 %v56
    %v293 = vpop.f32.mrf.mxu0
    %v294 = vadd.f32 %v226, %v293
    %v295 = vpop.f32.mrf.mxu0
    %296 = vdwg.mxu0
    %297 = vmatprep.subr.mxu0 0.0
    %298 = vmatpush1.msra.mxu0 %v113
    %299 = vmatprep.subr.mxu0 0.0
    %300 = vmatpush1.msra.mxu0 %v112
    %301 = vmatprep.subr.mxu0 0.0
    %302 = vmatpush1.msra.mxu0 %v111
    %303 = vmatprep.subr.mxu0 0.0
    %304 = vmatpush1.msra.mxu0 %v110
    %305 = vmatprep.subr.mxu0 0.0
    %306 = vmatpush1.msra.mxu0 %v109
    %307 = vmatprep.subr.mxu0 0.0
    %308 = vmatpush1.msra.mxu0 %v108
    %309 = vmatprep.subr.mxu0 0.0
    %310 = vmatpush1.msra.mxu0 %v107
    %311 = vmatprep.subr.mxu0 0.0
    %312 = vmatpush1.msra.mxu0 %v106
    %313 = vmatprep.subr.mxu0 0.0
    %314 = vmatpush1.msra.mxu0 %v105
    %315 = vmatprep.subr.mxu0 0.0
    %316 = vmatpush1.msra.mxu0 %v104
    %317 = vmatprep.subr.mxu0 0.0
    %318 = vmatpush1.msra.mxu0 %v103
    %319 = vmatprep.subr.mxu0 0.0
    %320 = vmatpush1.msra.mxu0 %v102
    %321 = vmatprep.subr.mxu0 0.0
    %322 = vmatpush1.msra.mxu0 %v101
    %323 = vmatprep.subr.mxu0 0.0
    %324 = vmatpush1.msra.mxu0 %v100
    %325 = vmatprep.subr.mxu0 0.0
    %326 = vmatpush1.msra.mxu0 %v99
    %327 = vmatprep.subr.mxu0 0.0
    %328 = vmatpush1.msra.mxu0 %v98
    %329 = vmatprep.subr.mxu0 0.0
    %330 = vmatpush2.msra.mxu0 %v129
    %331 = vmatprep.subr.mxu0 0.0
    %332 = vmatpush2.msra.mxu0 %v128
    %333 = vmatprep.subr.mxu0 0.0
    %334 = vmatpush2.msra.mxu0 %v127
    %335 = vmatprep.subr.mxu0 0.0
    %336 = vmatpush2.msra.mxu0 %v126
    %337 = vmatprep.subr.mxu0 0.0
    %338 = vmatpush2.msra.mxu0 %v125
    %339 = vmatprep.subr.mxu0 0.0
    %340 = vmatpush2.msra.mxu0 %v124
    %341 = vmatprep.subr.mxu0 0.0
    %342 = vmatpush2.msra.mxu0 %v123
    %343 = vmatprep.subr.mxu0 0.0
    %344 = vmatpush2.msra.mxu0 %v122
    %345 = vmatprep.subr.mxu0 0.0
    %346 = vmatpush2.msra.mxu0 %v121
    %347 = vmatprep.subr.mxu0 0.0
    %348 = vmatpush2.msra.mxu0 %v120
    %349 = vmatprep.subr.mxu0 0.0
    %350 = vmatpush2.msra.mxu0 %v119
    %351 = vmatprep.subr.mxu0 0.0
    %352 = vmatpush2.msra.mxu0 %v118
    %353 = vmatprep.subr.mxu0 0.0
    %354 = vmatpush2.msra.mxu0 %v117
    %355 = vmatprep.subr.mxu0 0.0
    %356 = vmatpush2.msra.mxu0 %v116
    %357 = vmatprep.subr.mxu0 0.0
    %358 = vmatpush2.msra.mxu0 %v115
    %359 = vmatprep.subr.mxu0 0.0
    %360 = vmatpush2.msra.mxu0 %v114
    %361 = vmatprep.mubr.f32.mxu0 %v59
    %362 = vmatmul.mubr.f32.gmra.mxu0 %v58
    %v363 = vpop.f32.mrf.mxu0
    %v364 = vadd.f32 %v294, %v363
    %v365 = vpop.f32.mrf.mxu0
    %366 = vdwg.mxu0
    %367 = vmatprep.subr.mxu0 0.0
    %368 = vmatpush1.msra.mxu0 %v145
    %369 = vmatprep.subr.mxu0 0.0
    %370 = vmatpush1.msra.mxu0 %v144
    %371 = vmatprep.subr.mxu0 0.0
    %372 = vmatpush1.msra.mxu0 %v143
    %373 = vmatprep.subr.mxu0 0.0
    %374 = vmatpush1.msra.mxu0 %v142
    %375 = vmatprep.subr.mxu0 0.0
    %376 = vmatpush1.msra.mxu0 %v141
    %377 = vmatprep.subr.mxu0 0.0
    %378 = vmatpush1.msra.mxu0 %v140
    %379 = vmatprep.subr.mxu0 0.0
    %380 = vmatpush1.msra.mxu0 %v139
    %381 = vmatprep.subr.mxu0 0.0
    %382 = vmatpush1.msra.mxu0 %v138
    %383 = vmatprep.subr.mxu0 0.0
    %384 = vmatpush1.msra.mxu0 %v137
    %385 = vmatprep.subr.mxu0 0.0
    %386 = vmatpush1.msra.mxu0 %v136
    %387 = vmatprep.subr.mxu0 0.0
    %388 = vmatpush1.msra.mxu0 %v135
    %389 = vmatprep.subr.mxu0 0.0
    %390 = vmatpush1.msra.mxu0 %v134
    %391 = vmatprep.subr.mxu0 0.0
    %392 = vmatpush1.msra.mxu0 %v133
    %393 = vmatprep.subr.mxu0 0.0
    %394 = vmatpush1.msra.mxu0 %v132
    %395 = vmatprep.subr.mxu0 0.0
    %396 = vmatpush1.msra.mxu0 %v131
    %397 = vmatprep.subr.mxu0 0.0
    %398 = vmatpush1.msra.mxu0 %v130
    %399 = vmatprep.subr.mxu0 0.0
    %400 = vmatpush2.msra.mxu0 %v161
    %401 = vmatprep.subr.mxu0 0.0
    %402 = vmatpush2.msra.mxu0 %v160
    %403 = vmatprep.subr.mxu0 0.0
    %404 = vmatpush2.msra.mxu0 %v159
    %405 = vmatprep.subr.mxu0 0.0
    %406 = vmatpush2.msra.mxu0 %v158
    %407 = vmatprep.subr.mxu0 0.0
    %408 = vmatpush2.msra.mxu0 %v157
    %409 = vmatprep.subr.mxu0 0.0
    %410 = vmatpush2.msra.mxu0 %v156
    %411 = vmatprep.subr.mxu0 0.0
    %412 = vmatpush2.msra.mxu0 %v155
    %413 = vmatprep.subr.mxu0 0.0
    %414 = vmatpush2.msra.mxu0 %v154
    %415 = vmatprep.subr.mxu0 0.0
    %416 = vmatpush2.msra.mxu0 %v153
    %417 = vmatprep.subr.mxu0 0.0
    %418 = vmatpush2.msra.mxu0 %v152
    %419 = vmatprep.subr.mxu0 0.0
    %420 = vmatpush2.msra.mxu0 %v151
    %421 = vmatprep.subr.mxu0 0.0
    %422 = vmatpush2.msra.mxu0 %v150
    %423 = vmatprep.subr.mxu0 0.0
    %424 = vmatpush2.msra.mxu0 %v149
    %425 = vmatprep.subr.mxu0 0.0
    %426 = vmatpush2.msra.mxu0 %v148
    %427 = vmatprep.subr.mxu0 0.0
    %428 = vmatpush2.msra.mxu0 %v147
    %429 = vmatprep.subr.mxu0 0.0
    %430 = vmatpush2.msra.mxu0 %v146
    %431 = vmatprep.mubr.f32.mxu0 %v61
    %432 = vmatmul.mubr.f32.gmra.mxu0 %v60
    %v433 = vpop.f32.mrf.mxu0
    %v434 = vadd.f32 %v364, %v433
    %v435 = vpop.f32.mrf.mxu0
    %436 = vdwg.mxu0
    %437 = vmatprep.subr.mxu0 0.0
    %438 = vmatpush1.msra.mxu0 %v177
    %439 = vmatprep.subr.mxu0 0.0
    %440 = vmatpush1.msra.mxu0 %v176
    %441 = vmatprep.subr.mxu0 0.0
    %442 = vmatpush1.msra.mxu0 %v175
    %443 = vmatprep.subr.mxu0 0.0
    %444 = vmatpush1.msra.mxu0 %v174
    %445 = vmatprep.subr.mxu0 0.0
    %446 = vmatpush1.msra.mxu0 %v173
    %447 = vmatprep.subr.mxu0 0.0
    %448 = vmatpush1.msra.mxu0 %v172
    %449 = vmatprep.subr.mxu0 0.0
    %450 = vmatpush1.msra.mxu0 %v171
    %451 = vmatprep.subr.mxu0 0.0
    %452 = vmatpush1.msra.mxu0 %v170
    %453 = vmatprep.subr.mxu0 0.0
    %454 = vmatpush1.msra.mxu0 %v169
    %455 = vmatprep.subr.mxu0 0.0
    %456 = vmatpush1.msra.mxu0 %v168
    %457 = vmatprep.subr.mxu0 0.0
    %458 = vmatpush1.msra.mxu0 %v167
    %459 = vmatprep.subr.mxu0 0.0
    %460 = vmatpush1.msra.mxu0 %v166
    %461 = vmatprep.subr.mxu0 0.0
    %462 = vmatpush1.msra.mxu0 %v165
    %463 = vmatprep.subr.mxu0 0.0
    %464 = vmatpush1.msra.mxu0 %v164
    %465 = vmatprep.subr.mxu0 0.0
    %466 = vmatpush1.msra.mxu0 %v163
    %467 = vmatprep.subr.mxu0 0.0
    %468 = vmatpush1.msra.mxu0 %v162
    %469 = vmatprep.subr.mxu0 0.0
    %470 = vmatpush2.msra.mxu0 %v193
    %471 = vmatprep.subr.mxu0 0.0
    %472 = vmatpush2.msra.mxu0 %v192
    %473 = vmatprep.subr.mxu0 0.0
    %474 = vmatpush2.msra.mxu0 %v191
    %475 = vmatprep.subr.mxu0 0.0
    %476 = vmatpush2.msra.mxu0 %v190
    %477 = vmatprep.subr.mxu0 0.0
    %478 = vmatpush2.msra.mxu0 %v189
    %479 = vmatprep.subr.mxu0 0.0
    %480 = vmatpush2.msra.mxu0 %v188
    %481 = vmatprep.subr.mxu0 0.0
    %482 = vmatpush2.msra.mxu0 %v187
    %483 = vmatprep.subr.mxu0 0.0
    %484 = vmatpush2.msra.mxu0 %v186
    %485 = vmatprep.subr.mxu0 0.0
    %486 = vmatpush2.msra.mxu0 %v185
    %487 = vmatprep.subr.mxu0 0.0
    %488 = vmatpush2.msra.mxu0 %v184
    %489 = vmatprep.subr.mxu0 0.0
    %490 = vmatpush2.msra.mxu0 %v183
    %491 = vmatprep.subr.mxu0 0.0
    %492 = vmatpush2.msra.mxu0 %v182
    %493 = vmatprep.subr.mxu0 0.0
    %494 = vmatpush2.msra.mxu0 %v181
    %495 = vmatprep.subr.mxu0 0.0
    %496 = vmatpush2.msra.mxu0 %v180
    %497 = vmatprep.subr.mxu0 0.0
    %498 = vmatpush2.msra.mxu0 %v179
    %499 = vmatprep.subr.mxu0 0.0
    %500 = vmatpush2.msra.mxu0 %v178
    %501 = vmatprep.mubr.f32.mxu0 %v63
    %502 = vmatmul.mubr.f32.gmra.mxu0 %v62
    %v503 = vpop.f32.mrf.mxu0
    %v504 = vadd.f32 %v434, %v503
    %v505 = vpop.f32.mrf.mxu0
    %506 = vdwg.mxu0
    %507 = vmatprep.subr.mxu0 0.0
    %508 = vmatpush1.msra.mxu0 %v209
    %509 = vmatprep.subr.mxu0 0.0
    %510 = vmatpush1.msra.mxu0 %v208
    %511 = vmatprep.subr.mxu0 0.0
    %512 = vmatpush1.msra.mxu0 %v207
    %513 = vmatprep.subr.mxu0 0.0
    %514 = vmatpush1.msra.mxu0 %v206
    %515 = vmatprep.subr.mxu0 0.0
    %516 = vmatpush1.msra.mxu0 %v205
    %517 = vmatprep.subr.mxu0 0.0
    %518 = vmatpush1.msra.mxu0 %v204
    %519 = vmatprep.subr.mxu0 0.0
    %520 = vmatpush1.msra.mxu0 %v203
    %521 = vmatprep.subr.mxu0 0.0
    %522 = vmatpush1.msra.mxu0 %v202
    %523 = vmatprep.subr.mxu0 0.0
    %524 = vmatpush1.msra.mxu0 %v201
    %525 = vmatprep.subr.mxu0 0.0
    %526 = vmatpush1.msra.mxu0 %v200
    %527 = vmatprep.subr.mxu0 0.0
    %528 = vmatpush1.msra.mxu0 %v199
    %529 = vmatprep.subr.mxu0 0.0
    %530 = vmatpush1.msra.mxu0 %v198
    %531 = vmatprep.subr.mxu0 0.0
    %532 = vmatpush1.msra.mxu0 %v197
    %533 = vmatprep.subr.mxu0 0.0
    %534 = vmatpush1.msra.mxu0 %v196
    %535 = vmatprep.subr.mxu0 0.0
    %536 = vmatpush1.msra.mxu0 %v195
    %537 = vmatprep.subr.mxu0 0.0
    %538 = vmatpush1.msra.mxu0 %v194
    %539 = vmatprep.subr.mxu0 0.0
    %540 = vmatpush2.msra.mxu0 %v225
    %541 = vmatprep.subr.mxu0 0.0
    %542 = vmatpush2.msra.mxu0 %v224
    %543 = vmatprep.subr.mxu0 0.0
    %544 = vmatpush2.msra.mxu0 %v223
    %545 = vmatprep.subr.mxu0 0.0
    %546 = vmatpush2.msra.mxu0 %v222
    %547 = vmatprep.subr.mxu0 0.0
    %548 = vmatpush2.msra.mxu0 %v221
    %549 = vmatprep.subr.mxu0 0.0
    %550 = vmatpush2.msra.mxu0 %v220
    %551 = vmatprep.subr.mxu0 0.0
    %552 = vmatpush2.msra.mxu0 %v219
    %553 = vmatprep.subr.mxu0 0.0
    %554 = vmatpush2.msra.mxu0 %v218
    %555 = vmatprep.subr.mxu0 0.0
    %556 = vmatpush2.msra.mxu0 %v217
    %557 = vmatprep.subr.mxu0 0.0
    %558 = vmatpush2.msra.mxu0 %v216
    %559 = vmatprep.subr.mxu0 0.0
    %560 = vmatpush2.msra.mxu0 %v215
    %561 = vmatprep.subr.mxu0 0.0
    %562 = vmatpush2.msra.mxu0 %v214
    %563 = vmatprep.subr.mxu0 0.0
    %564 = vmatpush2.msra.mxu0 %v213
    %565 = vmatprep.subr.mxu0 0.0
    %566 = vmatpush2.msra.mxu0 %v212
    %567 = vmatprep.subr.mxu0 0.0
    %568 = vmatpush2.msra.mxu0 %v211
    %569 = vmatprep.subr.mxu0 0.0
    %570 = vmatpush2.msra.mxu0 %v210
    %571 = vmatprep.mubr.f32.mxu0 %v65
    %572 = vmatmul.mubr.f32.gmra.mxu0 %v64
    %v573 = vpop.f32.mrf.mxu0
    %v574 = vadd.f32 %v504, %v573
    %v575 = vpop.f32.mrf.mxu0
    %576 = vdwg.mxu0
    %s577 = sld [smem:[#allocation2]]
    %v578 = vstv %s577
    %v579 = vadd.f32 %v574, %v578
    %v580 = vmax.f32 %v579, -1.0
    %v581 = vmin.f32 %v580, 1.0
    %582 = vst [vmem:[#allocation9] sm:$0xff] %v581
    // Predicated region
    $region30: #{tpu_custom_call.1} parent=1 // pred_check
      _
    $region31: #{tpu_custom_call.1} parent=1 // pred_check_branch
      %584 = sbr.rel (0) target = $region33
    $region32: #{tpu_custom_call.1} parent=1 // pred_region
      %s586 = ssub.s32 128, 128
      %587 = vsyncadd [#allocation5], %s586
      %s589 = sshll.u32 [#allocation9], 4
      %s590 = int_to_ptr.vmem [resolvable:$true] %s589
      %592 = dma.vmem_to_hbm [thread:$0]  %s590, 128, %s4, [#allocation5]
    $region33: #{tpu_custom_call.1} parent=1 // pred_fallthru
      _
    // Predicated region
    $region34: #{tpu_custom_call.1} parent=1 // pred_check
      _
    $region35: #{tpu_custom_call.1} parent=1 // pred_check_branch
      %594 = sbr.rel (0) target = $region37
    $region36: #{tpu_custom_call.1} parent=1 // pred_region
      %595 = dma.done [#allocation5], 128
    $region37: #{tpu_custom_call.1} parent=1 // pred_fallthru
      _
    %596 = vsyncpa [#allocation4], 1
    %597 = vsyncpa [#allocation7], 1
    %598 = vsyncpa [#allocation5], 1

</llo_original>
